<compile_context>
chip_gen: v5e
topology: v5e:2x2
jax: 0.10.0
libtpu: 0.0.40
codegen_flags: <defaults>
</compile_context>

<pallas_src>
import functools

import jax
import jax.numpy as jnp
from jax.experimental import pallas as pl
from jax.experimental.pallas import tpu as pltpu

LRELU_SLOPE = 0.2
BN_EPS = 1e-5
TM_MAX = 512                 # M-tile cap; fits comfortably in v7x's smaller (64 MiB) VMEM too
MXU_DTYPE = jnp.float32      # jnp.bfloat16 on v6e/v7x for 2x MXU rate (accumulation stays f32)


# ----------------------------------------------------------------------------
# small helpers (plain JAX glue)
# ----------------------------------------------------------------------------
def _round_up(x, m):
    return (x + m - 1) // m * m


def _pick_m_tiling(m):
    """Pad M to a multiple of 8 (or of TM_MAX when large) and pick the M tile size."""
    mp8 = _round_up(m, 8)
    if mp8 <= TM_MAX:
        return mp8, mp8
    return _round_up(m, TM_MAX), TM_MAX


def im2col(x_nhwc, k, stride, pad):
    """Conv patches via static strided slices + stack (no XLA gather).

    Returns ([B*OH*OW, k*k*C] with columns ordered (kh, kw, cin) — matching HWIO
    weights reshaped to (k*k*C, Cout)) and the output spatial shape (B, OH, OW).
    """
    B, H, W, C = x_nhwc.shape
    xp = jnp.pad(x_nhwc, ((0, 0), (pad, pad), (pad, pad), (0, 0)))
    OH = (H + 2 * pad - k) // stride + 1
    OW = (W + 2 * pad - k) // stride + 1
    cols = []
    for dh in range(k):
        for dw in range(k):
            sl = jax.lax.slice(
                xp,
                (0, dh, dw, 0),
                (B, dh + (OH - 1) * stride + 1, dw + (OW - 1) * stride + 1, C),
                (1, stride, stride, 1))
            cols.append(sl)                              # (B, OH, OW, C)
    patches = jnp.stack(cols, axis=3)                    # (B, OH, OW, k*k, C)
    return patches.reshape(B * OH * OW, k * k * C), (B, OH, OW)


# ----------------------------------------------------------------------------
# Pallas kernels
# ----------------------------------------------------------------------------
def _conv_mm_kernel(a_ref, w_ref, *out_refs, leaky, with_stats):
    """One M-tile of y = patches @ w (full K, full N single blocks).

    Optional fused LeakyReLU(0.2) epilogue and per-tile BatchNorm partial
    statistics (row 0 = per-channel sum, row 1 = per-channel sum of squares)."""
    y = jnp.dot(a_ref[...], w_ref[...], preferred_element_type=jnp.float32)
    if with_stats:
        y_ref, st_ref = out_refs
        s = jnp.sum(y, axis=0, keepdims=True)
        sq = jnp.sum(y * y, axis=0, keepdims=True)
        st_ref[0] = jnp.concatenate(
            [s, sq, jnp.zeros((6, y.shape[1]), jnp.float32)], axis=0)
    else:
        (y_ref,) = out_refs
    if leaky:
        y = jnp.where(y >= 0, y, LRELU_SLOPE * y)
    y_ref[...] = y.astype(y_ref.dtype)


def conv_matmul(patches, w, *, leaky, with_stats):
    """[M, K] @ [K, N] with the grid only over M tiles.

    Returns y with M padded up (zero patch rows give zero outputs; slice [:M] if
    needed) and, if with_stats, per-tile (sum, sumsq) stats of shape (nb, 8, N).
    """
    M, K = patches.shape
    N = w.shape[1]
    Mp, TM = _pick_m_tiling(M)
    a = patches.astype(MXU_DTYPE)
    if Mp != M:
        a = jnp.pad(a, ((0, Mp - M), (0, 0)))
    nb = Mp // TM

    in_specs = [pl.BlockSpec((TM, K), lambda i: (i, 0)),
                pl.BlockSpec((K, N), lambda i: (0, 0))]
    y_spec = pl.BlockSpec((TM, N), lambda i: (i, 0))
    y_shape = jax.ShapeDtypeStruct((Mp, N), jnp.float32)
    if with_stats:
        out_specs = (y_spec, pl.BlockSpec((1, 8, N), lambda i: (i, 0, 0)))
        out_shape = (y_shape, jax.ShapeDtypeStruct((nb, 8, N), jnp.float32))
    else:
        out_specs = y_spec
        out_shape = y_shape

    return pl.pallas_call(
        functools.partial(_conv_mm_kernel, leaky=leaky, with_stats=with_stats),
        out_shape=out_shape,
        grid_spec=pltpu.PrefetchScalarGridSpec(
            num_scalar_prefetch=0,
            grid=(nb,),
            in_specs=in_specs,
            out_specs=out_specs),
        compiler_params=pltpu.CompilerParams(dimension_semantics=("parallel",)),
    )(a, w.astype(MXU_DTYPE))


def _bn_act_kernel(x_ref, sc_ref, sh_ref, o_ref):
    y = x_ref[...] * sc_ref[...] + sh_ref[...]
    o_ref[...] = jnp.where(y >= 0, y, LRELU_SLOPE * y)


def bn_act(x, scale, shift):
    """y = LeakyReLU_0.2(x * scale + shift), per-channel scale/shift; x: [Mp, C]."""
    M, C = x.shape
    Mp, TM = _pick_m_tiling(M)
    if Mp != M:
        x = jnp.pad(x, ((0, Mp - M), (0, 0)))
    return pl.pallas_call(
        _bn_act_kernel,
        out_shape=jax.ShapeDtypeStruct((Mp, C), jnp.float32),
        grid_spec=pltpu.PrefetchScalarGridSpec(
            num_scalar_prefetch=0,
            grid=(Mp // TM,),
            in_specs=[pl.BlockSpec((TM, C), lambda i: (i, 0)),
                      pl.BlockSpec((1, C), lambda i: (0, 0)),
                      pl.BlockSpec((1, C), lambda i: (0, 0))],
            out_specs=pl.BlockSpec((TM, C), lambda i: (i, 0))),
        compiler_params=pltpu.CompilerParams(dimension_semantics=("parallel",)),
    )(x.astype(jnp.float32),
      scale.reshape(1, C).astype(jnp.float32),
      shift.reshape(1, C).astype(jnp.float32))


def _conv_pool_stats_kernel(p_ref, w_ref, pooled_ref, st_ref):
    """y = p @ w for one (batch, spatial-chunk) tile; y is never written to HBM.
    Accumulates the per-batch spatial sums (AdaptiveAvgPool2d numerator) and the
    per-batch per-channel sum / sum-of-squares (BatchNorm statistics)."""
    y = jnp.dot(p_ref[0], w_ref[...], preferred_element_type=jnp.float32)   # (TS, C)
    s = jnp.sum(y, axis=0, keepdims=True)            # (1, C)
    sq = jnp.sum(y * y, axis=0, keepdims=True)       # (1, C)

    @pl.when(pl.program_id(1) == 0)
    def _():
        pooled_ref[...] = jnp.zeros_like(pooled_ref)
        st_ref[...] = jnp.zeros_like(st_ref)

    pooled_ref[0] += s
    st_ref[0] += jnp.concatenate(
        [s, sq, jnp.zeros((6, s.shape[1]), jnp.float32)], axis=0)


def conv_pool_stats(patches_bsk, w):
    """patches_bsk: (B, Sp, K), Sp a multiple of the spatial tile (zero rows are harmless).

    Returns (pooled (B, Cout) per-batch spatial sums,
             stats  (B, 8, Cout) with rows 0/1 = per-batch channel sum / sumsq)."""
    B, Sp, K = patches_bsk.shape
    N = w.shape[1]
    TS = Sp if Sp <= TM_MAX else TM_MAX
    pooled, st = pl.pallas_call(
        _conv_pool_stats_kernel,
        out_shape=(jax.ShapeDtypeStruct((B, 1, N), jnp.float32),
                   jax.ShapeDtypeStruct((B, 8, N), jnp.float32)),
        grid_spec=pltpu.PrefetchScalarGridSpec(
            num_scalar_prefetch=0,
            grid=(B, Sp // TS),
            in_specs=[pl.BlockSpec((1, TS, K), lambda b, s: (b, s, 0)),
                      pl.BlockSpec((K, N), lambda b, s: (0, 0))],
            out_specs=(pl.BlockSpec((1, 1, N), lambda b, s: (b, 0, 0)),
                       pl.BlockSpec((1, 8, N), lambda b, s: (b, 0, 0)))),
        compiler_params=pltpu.CompilerParams(
            dimension_semantics=("parallel", "arbitrary")),
    )(patches_bsk.astype(MXU_DTYPE), w.astype(MXU_DTYPE))
    return pooled[:, 0, :], st


# ----------------------------------------------------------------------------
# Full forward (encoder path of UNetGenerator with style=None, n_layer=3)
# ----------------------------------------------------------------------------
def unet_forward(x_nchw, params):
    x = jnp.transpose(x_nchw, (0, 2, 3, 1)).astype(jnp.float32)     # NCHW -> NHWC
    B = x.shape[0]

    # L1: conv(Cin->ngf, k4 s2 p1, no bias); the next block's LeakyReLU(0.2) is fused in.
    p1, (_, OH1, OW1) = im2col(x, 4, 2, 1)
    w1 = params['w1'].reshape(-1, params['w1'].shape[-1])
    M1 = B * OH1 * OW1
    a1 = conv_matmul(p1, w1, leaky=True, with_stats=False)[:M1]
    a1_img = a1.reshape(B, OH1, OW1, -1)

    # L2: conv(ngf->2ngf, k4 s1 p1) with fused per-tile BatchNorm partial statistics.
    p2, (_, OH2, OW2) = im2col(a1_img, 4, 1, 1)
    w2 = params['w2'].reshape(-1, params['w2'].shape[-1])
    M2 = B * OH2 * OW2
    y2p, st2 = conv_matmul(p2, w2, leaky=False, with_stats=True)
    cnt2 = jnp.float32(M2)
    mu2 = st2[:, 0, :].sum(axis=0) / cnt2
    var2 = jnp.maximum(st2[:, 1, :].sum(axis=0) / cnt2 - mu2 * mu2, 0.0)
    inv2 = jax.lax.rsqrt(var2 + BN_EPS)
    scale2 = params['gamma2'] * inv2
    shift2 = params['beta2'] - mu2 * scale2
    a2 = bn_act(y2p, scale2, shift2)[:M2]            # BN affine + next block's LeakyReLU
    a2_img = a2.reshape(B, OH2, OW2, -1)

    # L3: conv(2ngf->4ngf, k4 s1 p1) -> BatchNorm -> AdaptiveAvgPool2d(1,1), fully fused:
    # the conv output never touches HBM; the kernel emits pool sums + BN stats.
    p3, (_, OH3, OW3) = im2col(a2_img, 4, 1, 1)
    w3 = params['w3'].reshape(-1, params['w3'].shape[-1])
    S3 = OH3 * OW3
    Sp3, _ = _pick_m_tiling(S3)
    p3b = p3.reshape(B, S3, -1)
    if Sp3 != S3:
        p3b = jnp.pad(p3b, ((0, 0), (0, Sp3 - S3), (0, 0)))
    pooled, st3 = conv_pool_stats(p3b, w3)           # (B, 4ngf) sums, (B, 8, 4ngf) stats
    cnt3 = jnp.float32(B * S3)
    mu3 = st3[:, 0, :].sum(axis=0) / cnt3
    var3 = jnp.maximum(st3[:, 1, :].sum(axis=0) / cnt3 - mu3 * mu3, 0.0)
    inv3 = jax.lax.rsqrt(var3 + BN_EPS)
    scale3 = params['gamma3'] * inv3
    shift3 = params['beta3'] - mu3 * scale3
    # mean over space of BN(y3) == BN affine applied to the spatial mean (per channel).
    encode = (pooled / jnp.float32(S3)) * scale3[None, :] + shift3[None, :]
    return encode                                    # (B, 4*ngf) == .view(B, -1)


# ----------------------------------------------------------------------------
# Pure-JAX reference (same math, XLA convs) for the correctness check
# ----------------------------------------------------------------------------
def reference_forward(x_nchw, params):
    x = jnp.transpose(x_nchw, (0, 2, 3, 1)).astype(jnp.float32)

    def conv(x, w, stride):
        return jax.lax.conv_general_dilated(
            x, w, (stride, stride), ((1, 1), (1, 1)),
            dimension_numbers=('NHWC', 'HWIO', 'NHWC'),
            precision=jax.lax.Precision.HIGHEST)

    def lrelu(v):
        return jnp.where(v >= 0, v, LRELU_SLOPE * v)

    def bn(y, g, b):
        mu = jnp.mean(y, axis=(0, 1, 2))
        var = jnp.mean(jnp.square(y - mu), axis=(0, 1, 2))
        return (y - mu) * jax.lax.rsqrt(var + BN_EPS) * g + b

    a1 = lrelu(conv(x, params['w1'], 2))
    y2 = bn(conv(a1, params['w2'], 1), params['gamma2'], params['beta2'])
    a2 = lrelu(y2)
    y3 = bn(conv(a2, params['w3'], 1), params['gamma3'], params['beta3'])
    return jnp.mean(y3, axis=(1, 2))


if __name__ == "__main__":
    key = jax.random.PRNGKey(0)
    B, Cin, H, W = 2, 4, 16, 16
    ngf = 8

    ks = jax.random.split(key, 6)
    # weights in HWIO layout == PyTorch (Cout,Cin,kh,kw).transpose(2,3,1,0); convs have bias=False
    params = {
        'w1': 0.02 * jax.random.normal(ks[0], (4, 4, Cin, ngf), jnp.float32),
        'w2': 0.02 * jax.random.normal(ks[1], (4, 4, ngf, 2 * ngf), jnp.float32),
        'w3': 0.02 * jax.random.normal(ks[2], (4, 4, 2 * ngf, 4 * ngf), jnp.float32),
        'gamma2': 1.0 + 0.02 * jax.random.normal(ks[3], (2 * ngf,), jnp.float32),
        'beta2': jnp.zeros((2 * ngf,), jnp.float32),
        'gamma3': 1.0 + 0.02 * jax.random.normal(ks[4], (4 * ngf,), jnp.float32),
        'beta3': jnp.zeros((4 * ngf,), jnp.float32),
    }
    x = jax.random.normal(ks[5], (B, Cin, H, W), jnp.float32)

    out = jax.block_until_ready(jax.jit(unet_forward)(x, params))
    assert out.shape == (B, 4 * ngf), out.shape

    ref = reference_forward(x, params)
    if not jnp.allclose(out, ref, atol=1e-2, rtol=1e-2):
        raise AssertionError("Pallas result does not match JAX reference")

    print("KERNEL_OK")
</pallas_src>

<mosaic_0001>
module attributes {stable_mosaic.version = 11 : i64} {
  func.func @_conv_mm_kernel(%arg0: i32, %arg1: memref<128x64xf32, #tpu.memory_space<vmem>>, %arg2: memref<64x8xf32, #tpu.memory_space<vmem>>, %arg3: memref<128x8xf32, #tpu.memory_space<vmem>>) attributes {dimension_semantics = [#tpu.dimension_semantics<parallel>], iteration_bounds = array<i64: 1>, scalar_prefetch = 0 : i64, scratch_operands = 0 : i64, tpu.core_type = #tpu.core_type<tc>, window_params = [{transform_indices = @transform_0, window_bounds = array<i64: 128, 64>}, {pipeline_mode = #tpu.pipeline_mode<synchronous>, transform_indices = @transform_1, window_bounds = array<i64: 64, 8>}, {transform_indices = @transform_2, window_bounds = array<i64: 128, 8>}]} {
    %c0 = arith.constant 0 : index
    %c0_0 = arith.constant 0 : index
    %0 = vector.load %arg1[%c0, %c0_0] : memref<128x64xf32, #tpu.memory_space<vmem>>, vector<128x64xf32>
    %c0_1 = arith.constant 0 : index
    %c0_2 = arith.constant 0 : index
    %1 = vector.load %arg2[%c0_1, %c0_2] : memref<64x8xf32, #tpu.memory_space<vmem>>, vector<64x8xf32>
    %cst = arith.constant dense<0.000000e+00> : vector<128x8xf32>
    %2 = tpu.matmul %0, %1, %cst {dimension_numbers = #tpu.dot_dimension_numbers<[1], [0], [0], [1], [0, 0, 1, 1], [], []>} : vector<128x64xf32>, vector<64x8xf32>, vector<128x8xf32> -> vector<128x8xf32>
    %cst_3 = arith.constant 0.000000e+00 : f32
    %3 = vector.broadcast %cst_3 : f32 to vector<128x8xf32>
    %4 = arith.cmpf oge, %2, %3 : vector<128x8xf32>
    %cst_4 = arith.constant 2.000000e-01 : f32
    %5 = vector.broadcast %cst_4 : f32 to vector<128x8xf32>
    %6 = arith.mulf %5, %2 : vector<128x8xf32>
    %7 = arith.select %4, %2, %6 : vector<128x8xi1>, vector<128x8xf32>
    %c0_5 = arith.constant 0 : index
    %c0_6 = arith.constant 0 : index
    %8 = vector.load %arg3[%c0_5, %c0_6] : memref<128x8xf32, #tpu.memory_space<vmem>>, vector<128x8xf32>
    tpu.vector_store %arg3[%c0_5, %c0_6], %7 {strides = array<i32>} : memref<128x8xf32, #tpu.memory_space<vmem>>, vector<128x8xf32>,
    return
  }
  func.func @transform_0(%arg0: i32) -> (i32, i32) {
    %c0_i32 = arith.constant 0 : i32
    %c0_i32_0 = arith.constant 0 : i32
    return %arg0, %c0_i32 : i32, i32
  }
  func.func @transform_1(%arg0: i32) -> (i32, i32) {
    %c0_i32 = arith.constant 0 : i32
    %c0_i32_0 = arith.constant 0 : i32
    %c0_i32_1 = arith.constant 0 : i32
    return %c0_i32, %c0_i32_0 : i32, i32
  }
  func.func @transform_2(%arg0: i32) -> (i32, i32) {
    %c0_i32 = arith.constant 0 : i32
    %c0_i32_0 = arith.constant 0 : i32
    return %arg0, %c0_i32 : i32, i32
  }
}

module attributes {stable_mosaic.version = 11 : i64} {
  func.func @_conv_mm_kernel(%arg0: i32, %arg1: memref<104x128xf32, #tpu.memory_space<vmem>>, %arg2: memref<128x16xf32, #tpu.memory_space<vmem>>, %arg3: memref<104x16xf32, #tpu.memory_space<vmem>>, %arg4: memref<1x8x16xf32, #tpu.memory_space<vmem>>) attributes {dimension_semantics = [#tpu.dimension_semantics<parallel>], iteration_bounds = array<i64: 1>, scalar_prefetch = 0 : i64, scratch_operands = 0 : i64, tpu.core_type = #tpu.core_type<tc>, window_params = [{transform_indices = @transform_0, window_bounds = array<i64: 104, 128>}, {pipeline_mode = #tpu.pipeline_mode<synchronous>, transform_indices = @transform_1, window_bounds = array<i64: 128, 16>}, {transform_indices = @transform_2, window_bounds = array<i64: 104, 16>}, {transform_indices = @transform_3, window_bounds = array<i64: 1, 8, 16>}]} {
    %c0 = arith.constant 0 : index
    %c0_0 = arith.constant 0 : index
    %0 = vector.load %arg1[%c0, %c0_0] : memref<104x128xf32, #tpu.memory_space<vmem>>, vector<104x128xf32>
    %c0_1 = arith.constant 0 : index
    %c0_2 = arith.constant 0 : index
    %1 = vector.load %arg2[%c0_1, %c0_2] : memref<128x16xf32, #tpu.memory_space<vmem>>, vector<128x16xf32>
    %cst = arith.constant dense<0.000000e+00> : vector<104x16xf32>
    %2 = tpu.matmul %0, %1, %cst {dimension_numbers = #tpu.dot_dimension_numbers<[1], [0], [0], [1], [0, 0, 1, 1], [], []>} : vector<104x128xf32>, vector<128x16xf32>, vector<104x16xf32> -> vector<104x16xf32>
    %cst_3 = arith.constant dense<0.000000e+00> : vector<16xf32>
    %3 = vector.multi_reduction <add>, %2, %cst_3 [0] : vector<104x16xf32> to vector<16xf32>
    %4 = vector.shape_cast %3 : vector<16xf32> to vector<1x16xf32>
    %5 = arith.mulf %2, %2 : vector<104x16xf32>
    %cst_4 = arith.constant dense<0.000000e+00> : vector<16xf32>
    %6 = vector.multi_reduction <add>, %5, %cst_4 [0] : vector<104x16xf32> to vector<16xf32>
    %7 = vector.shape_cast %6 : vector<16xf32> to vector<1x16xf32>
    %cst_5 = arith.constant 0.000000e+00 : f32
    %8 = vector.broadcast %cst_5 : f32 to vector<6x16xf32>
    %9 = tpu.concatenate %4, %7, %8 in 0 : vector<1x16xf32>, vector<1x16xf32>, vector<6x16xf32> -> vector<8x16xf32>
    %c0_6 = arith.constant 0 : index
    %c0_7 = arith.constant 0 : index
    %c0_8 = arith.constant 0 : index
    %10 = vector.load %arg4[%c0_6, %c0_7, %c0_8] : memref<1x8x16xf32, #tpu.memory_space<vmem>>, vector<1x8x16xf32>
    %11 = vector.shape_cast %10 : vector<1x8x16xf32> to vector<8x16xf32>
    %12 = vector.shape_cast %9 : vector<8x16xf32> to vector<1x8x16xf32>
    tpu.vector_store %arg4[%c0_6, %c0_7, %c0_8], %12 {strides = array<i32>} : memref<1x8x16xf32, #tpu.memory_space<vmem>>, vector<1x8x16xf32>,
    %c0_9 = arith.constant 0 : index
    %c0_10 = arith.constant 0 : index
    %13 = vector.load %arg3[%c0_9, %c0_10] : memref<104x16xf32, #tpu.memory_space<vmem>>, vector<104x16xf32>
    tpu.vector_store %arg3[%c0_9, %c0_10], %2 {strides = array<i32>} : memref<104x16xf32, #tpu.memory_space<vmem>>, vector<104x16xf32>,
    return
  }
  func.func @transform_0(%arg0: i32) -> (i32, i32) {
    %c0_i32 = arith.constant 0 : i32
    %c0_i32_0 = arith.constant 0 : i32
    return %arg0, %c0_i32 : i32, i32
  }
  func.func @transform_1(%arg0: i32) -> (i32, i32) {
    %c0_i32 = arith.constant 0 : i32
    %c0_i32_0 = arith.constant 0 : i32
    %c0_i32_1 = arith.constant 0 : i32
    return %c0_i32, %c0_i32_0 : i32, i32
  }
  func.func @transform_2(%arg0: i32) -> (i32, i32) {
    %c0_i32 = arith.constant 0 : i32
    %c0_i32_0 = arith.constant 0 : i32
    return %arg0, %c0_i32 : i32, i32
  }
  func.func @transform_3(%arg0: i32) -> (i32, i32, i32) {
    %c0_i32 = arith.constant 0 : i32
    %c0_i32_0 = arith.constant 0 : i32
    %c0_i32_1 = arith.constant 0 : i32
    return %arg0, %c0_i32, %c0_i32_0 : i32, i32, i32
  }
}

module attributes {stable_mosaic.version = 11 : i64} {
  func.func @_bn_act_kernel(%arg0: i32, %arg1: memref<104x16xf32, #tpu.memory_space<vmem>>, %arg2: memref<1x16xf32, #tpu.memory_space<vmem>>, %arg3: memref<1x16xf32, #tpu.memory_space<vmem>>, %arg4: memref<104x16xf32, #tpu.memory_space<vmem>>) attributes {dimension_semantics = [#tpu.dimension_semantics<parallel>], iteration_bounds = array<i64: 1>, scalar_prefetch = 0 : i64, scratch_operands = 0 : i64, tpu.core_type = #tpu.core_type<tc>, window_params = [{transform_indices = @transform_0, window_bounds = array<i64: 104, 16>}, {pipeline_mode = #tpu.pipeline_mode<synchronous>, transform_indices = @transform_1, window_bounds = array<i64: 1, 16>}, {pipeline_mode = #tpu.pipeline_mode<synchronous>, transform_indices = @transform_2, window_bounds = array<i64: 1, 16>}, {transform_indices = @transform_3, window_bounds = array<i64: 104, 16>}]} {
    %c0 = arith.constant 0 : index
    %c0_0 = arith.constant 0 : index
    %0 = vector.load %arg1[%c0, %c0_0] : memref<104x16xf32, #tpu.memory_space<vmem>>, vector<104x16xf32>
    %c0_1 = arith.constant 0 : index
    %c0_2 = arith.constant 0 : index
    %1 = vector.load %arg2[%c0_1, %c0_2] : memref<1x16xf32, #tpu.memory_space<vmem>>, vector<1x16xf32>
    %2 = vector.broadcast %1 : vector<1x16xf32> to vector<104x16xf32>
    %3 = arith.mulf %0, %2 : vector<104x16xf32>
    %c0_3 = arith.constant 0 : index
    %c0_4 = arith.constant 0 : index
    %4 = vector.load %arg3[%c0_3, %c0_4] : memref<1x16xf32, #tpu.memory_space<vmem>>, vector<1x16xf32>
    %5 = vector.broadcast %4 : vector<1x16xf32> to vector<104x16xf32>
    %6 = arith.addf %3, %5 : vector<104x16xf32>
    %cst = arith.constant 0.000000e+00 : f32
    %7 = vector.broadcast %cst : f32 to vector<104x16xf32>
    %8 = arith.cmpf oge, %6, %7 : vector<104x16xf32>
    %cst_5 = arith.constant 2.000000e-01 : f32
    %9 = vector.broadcast %cst_5 : f32 to vector<104x16xf32>
    %10 = arith.mulf %9, %6 : vector<104x16xf32>
    %11 = arith.select %8, %6, %10 : vector<104x16xi1>, vector<104x16xf32>
    %c0_6 = arith.constant 0 : index
    %c0_7 = arith.constant 0 : index
    %12 = vector.load %arg4[%c0_6, %c0_7] : memref<104x16xf32, #tpu.memory_space<vmem>>, vector<104x16xf32>
    tpu.vector_store %arg4[%c0_6, %c0_7], %11 {strides = array<i32>} : memref<104x16xf32, #tpu.memory_space<vmem>>, vector<104x16xf32>,
    return
  }
  func.func @transform_0(%arg0: i32) -> (i32, i32) {
    %c0_i32 = arith.constant 0 : i32
    %c0_i32_0 = arith.constant 0 : i32
    return %arg0, %c0_i32 : i32, i32
  }
  func.func @transform_1(%arg0: i32) -> (i32, i32) {
    %c0_i32 = arith.constant 0 : i32
    %c0_i32_0 = arith.constant 0 : i32
    %c0_i32_1 = arith.constant 0 : i32
    return %c0_i32, %c0_i32_0 : i32, i32
  }
  func.func @transform_2(%arg0: i32) -> (i32, i32) {
    %c0_i32 = arith.constant 0 : i32
    %c0_i32_0 = arith.constant 0 : i32
    %c0_i32_1 = arith.constant 0 : i32
    return %c0_i32, %c0_i32_0 : i32, i32
  }
  func.func @transform_3(%arg0: i32) -> (i32, i32) {
    %c0_i32 = arith.constant 0 : i32
    %c0_i32_0 = arith.constant 0 : i32
    return %arg0, %c0_i32 : i32, i32
  }
}

module attributes {stable_mosaic.version = 11 : i64} {
  func.func @_conv_pool_stats_kernel(%arg0: i32, %arg1: i32, %arg2: memref<1x40x256xf32, #tpu.memory_space<vmem>>, %arg3: memref<256x32xf32, #tpu.memory_space<vmem>>, %arg4: memref<1x1x32xf32, #tpu.memory_space<vmem>>, %arg5: memref<1x8x32xf32, #tpu.memory_space<vmem>>) attributes {dimension_semantics = [#tpu.dimension_semantics<parallel>, #tpu.dimension_semantics<arbitrary>], iteration_bounds = array<i64: 2, 1>, scalar_prefetch = 0 : i64, scratch_operands = 0 : i64, tpu.core_type = #tpu.core_type<tc>, window_params = [{transform_indices = @transform_0, window_bounds = array<i64: 1, 40, 256>}, {pipeline_mode = #tpu.pipeline_mode<synchronous>, transform_indices = @transform_1, window_bounds = array<i64: 256, 32>}, {transform_indices = @transform_2, window_bounds = array<i64: 1, 1, 32>}, {transform_indices = @transform_3, window_bounds = array<i64: 1, 8, 32>}]} {
    %c0 = arith.constant 0 : index
    %c0_0 = arith.constant 0 : index
    %c0_1 = arith.constant 0 : index
    %0 = vector.load %arg2[%c0, %c0_0, %c0_1] : memref<1x40x256xf32, #tpu.memory_space<vmem>>, vector<1x40x256xf32>
    %1 = vector.shape_cast %0 : vector<1x40x256xf32> to vector<40x256xf32>
    %c0_2 = arith.constant 0 : index
    %c0_3 = arith.constant 0 : index
    %2 = vector.load %arg3[%c0_2, %c0_3] : memref<256x32xf32, #tpu.memory_space<vmem>>, vector<256x32xf32>
    %cst = arith.constant dense<0.000000e+00> : vector<40x32xf32>
    %3 = tpu.matmul %1, %2, %cst {dimension_numbers = #tpu.dot_dimension_numbers<[1], [0], [0], [1], [0, 0, 1, 1], [], []>} : vector<40x256xf32>, vector<256x32xf32>, vector<40x32xf32> -> vector<40x32xf32>
    %cst_4 = arith.constant dense<0.000000e+00> : vector<32xf32>
    %4 = vector.multi_reduction <add>, %3, %cst_4 [0] : vector<40x32xf32> to vector<32xf32>
    %5 = vector.shape_cast %4 : vector<32xf32> to vector<1x32xf32>
    %6 = arith.mulf %3, %3 : vector<40x32xf32>
    %cst_5 = arith.constant dense<0.000000e+00> : vector<32xf32>
    %7 = vector.multi_reduction <add>, %6, %cst_5 [0] : vector<40x32xf32> to vector<32xf32>
    %8 = vector.shape_cast %7 : vector<32xf32> to vector<1x32xf32>
    %c0_i32 = arith.constant 0 : i32
    %9 = arith.cmpi eq, %arg1, %c0_i32 : i32
    %10 = arith.extui %9 : i1 to i32
    %c0_i32_6 = arith.constant 0 : i32
    %11 = arith.cmpi ne, %10, %c0_i32_6 : i32
    scf.if %11 {
      %cst_20 = arith.constant 0.000000e+00 : f32
      %26 = vector.broadcast %cst_20 : f32 to vector<1x1x32xf32>
      %c0_21 = arith.constant 0 : index
      %c0_22 = arith.constant 0 : index
      %c0_23 = arith.constant 0 : index
      %27 = vector.load %arg4[%c0_21, %c0_22, %c0_23] : memref<1x1x32xf32, #tpu.memory_space<vmem>>, vector<1x1x32xf32>
      tpu.vector_store %arg4[%c0_21, %c0_22, %c0_23], %26 {strides = array<i32>} : memref<1x1x32xf32, #tpu.memory_space<vmem>>, vector<1x1x32xf32>,
      %cst_24 = arith.constant 0.000000e+00 : f32
      %28 = vector.broadcast %cst_24 : f32 to vector<1x8x32xf32>
      %c0_25 = arith.constant 0 : index
      %c0_26 = arith.constant 0 : index
      %c0_27 = arith.constant 0 : index
      %29 = vector.load %arg5[%c0_25, %c0_26, %c0_27] : memref<1x8x32xf32, #tpu.memory_space<vmem>>, vector<1x8x32xf32>
      tpu.vector_store %arg5[%c0_25, %c0_26, %c0_27], %28 {strides = array<i32>} : memref<1x8x32xf32, #tpu.memory_space<vmem>>, vector<1x8x32xf32>,
    } else {
    }
    %c0_7 = arith.constant 0 : index
    %c0_8 = arith.constant 0 : index
    %c0_9 = arith.constant 0 : index
    %12 = vector.load %arg4[%c0_7, %c0_8, %c0_9] : memref<1x1x32xf32, #tpu.memory_space<vmem>>, vector<1x1x32xf32>
    %13 = vector.shape_cast %12 : vector<1x1x32xf32> to vector<1x32xf32>
    %14 = arith.addf %13, %5 : vector<1x32xf32>
    %c0_10 = arith.constant 0 : index
    %c0_11 = arith.constant 0 : index
    %c0_12 = arith.constant 0 : index
    %15 = vector.load %arg4[%c0_10, %c0_11, %c0_12] : memref<1x1x32xf32, #tpu.memory_space<vmem>>, vector<1x1x32xf32>
    %16 = vector.shape_cast %15 : vector<1x1x32xf32> to vector<1x32xf32>
    %17 = vector.shape_cast %14 : vector<1x32xf32> to vector<1x1x32xf32>
    tpu.vector_store %arg4[%c0_10, %c0_11, %c0_12], %17 {strides = array<i32>} : memref<1x1x32xf32, #tpu.memory_space<vmem>>, vector<1x1x32xf32>,
    %c0_13 = arith.constant 0 : index
    %c0_14 = arith.constant 0 : index
    %c0_15 = arith.constant 0 : index
    %18 = vector.load %arg5[%c0_13, %c0_14, %c0_15] : memref<1x8x32xf32, #tpu.memory_space<vmem>>, vector<1x8x32xf32>
    %19 = vector.shape_cast %18 : vector<1x8x32xf32> to vector<8x32xf32>
    %cst_16 = arith.constant 0.000000e+00 : f32
    %20 = vector.broadcast %cst_16 : f32 to vector<6x32xf32>
    %21 = tpu.concatenate %5, %8, %20 in 0 : vector<1x32xf32>, vector<1x32xf32>, vector<6x32xf32> -> vector<8x32xf32>
    %22 = arith.addf %19, %21 : vector<8x32xf32>
    %c0_17 = arith.constant 0 : index
    %c0_18 = arith.constant 0 : index
    %c0_19 = arith.constant 0 : index
    %23 = vector.load %arg5[%c0_17, %c0_18, %c0_19] : memref<1x8x32xf32, #tpu.memory_space<vmem>>, vector<1x8x32xf32>
    %24 = vector.shape_cast %23 : vector<1x8x32xf32> to vector<8x32xf32>
    %25 = vector.shape_cast %22 : vector<8x32xf32> to vector<1x8x32xf32>
    tpu.vector_store %arg5[%c0_17, %c0_18, %c0_19], %25 {strides = array<i32>} : memref<1x8x32xf32, #tpu.memory_space<vmem>>, vector<1x8x32xf32>,
    return
  }
  func.func @transform_0(%arg0: i32, %arg1: i32) -> (i32, i32, i32) {
    %c0_i32 = arith.constant 0 : i32
    %c0_i32_0 = arith.constant 0 : i32
    return %arg0, %arg1, %c0_i32 : i32, i32, i32
  }
  func.func @transform_1(%arg0: i32, %arg1: i32) -> (i32, i32) {
    %c0_i32 = arith.constant 0 : i32
    %c0_i32_0 = arith.constant 0 : i32
    %c0_i32_1 = arith.constant 0 : i32
    return %c0_i32, %c0_i32_0 : i32, i32
  }
  func.func @transform_2(%arg0: i32, %arg1: i32) -> (i32, i32, i32) {
    %c0_i32 = arith.constant 0 : i32
    %c0_i32_0 = arith.constant 0 : i32
    %c0_i32_1 = arith.constant 0 : i32
    return %arg0, %c0_i32, %c0_i32_0 : i32, i32, i32
  }
  func.func @transform_3(%arg0: i32, %arg1: i32) -> (i32, i32, i32) {
    %c0_i32 = arith.constant 0 : i32
    %c0_i32_0 = arith.constant 0 : i32
    %c0_i32_1 = arith.constant 0 : i32
    return %arg0, %c0_i32, %c0_i32_0 : i32, i32, i32
  }
}

</mosaic_0001>

<llo_original>
// kernel: unet_forward.4
$region0: #{unet_forward.4}
  #allocation0 [shape = 'u32[]', space=smem, size = 0x4, offset = 0x4, fixed_abs, tag = 'smem constant byte address 0x4 - core index']
  #allocation1 [shape = 'u32[72,128]{1,0:T(1,128)}', space=vmem, size = 0x9000, scoped, tag = 'internal scratch']
  %s0 = inlined_call_operand.vmem [shape: f32[128,64], index: 0, kind: input, shape index: {}]
  %s1 = inlined_call_operand.vmem [shape: f32[64,8], index: 1, kind: input, shape index: {}]
  %s2 = inlined_call_operand.vmem [shape: f32[128,8], index: 2, kind: output, shape index: {}]
  %s3 = sld [smem:[#allocation0]]
  $region18: #{unet_forward.4} parent=0
    _
  %s5 = ssub.s32 1, %s3
  %s6 = scalar_select 0, %s5, %s3
  // Predicated region
  $region2: #{unet_forward.4} parent=0 // pred_check
    _
  $region3: #{unet_forward.4} parent=0 // pred_check_branch
    %8 = sbr.rel (0) target = $region5
  $region4: #{unet_forward.4} parent=0 // pred_region
    _
  $region5: #{unet_forward.4} parent=0 // pred_fallthru
    _
  // Predicated region
  $region6: #{unet_forward.4} parent=0 // pred_check
    _
  $region7: #{unet_forward.4} parent=0 // pred_check_branch
    %10 = sbr.rel (0) target = $region9
  $region8: #{unet_forward.4} parent=0 // pred_region
    _
  $region9: #{unet_forward.4} parent=0 // pred_fallthru
    _
  %v11 = vld [vmem:[%s0] sm:$0xff]
  %v12 = vld [vmem:[%s0 + $0x8] sm:$0xff]
  %v13 = vld [vmem:[%s0 + $0x10] sm:$0xff]
  %v14 = vld [vmem:[%s0 + $0x18] sm:$0xff]
  %v15 = vld [vmem:[%s0 + $0x20] sm:$0xff]
  %v16 = vld [vmem:[%s0 + $0x28] sm:$0xff]
  %v17 = vld [vmem:[%s0 + $0x30] sm:$0xff]
  %v18 = vld [vmem:[%s0 + $0x38] sm:$0xff]
  %v19 = vld [vmem:[%s0 + $0x40] sm:$0xff]
  %v20 = vld [vmem:[%s0 + $0x48] sm:$0xff]
  %v21 = vld [vmem:[%s0 + $0x50] sm:$0xff]
  %v22 = vld [vmem:[%s0 + $0x58] sm:$0xff]
  %v23 = vld [vmem:[%s0 + $0x60] sm:$0xff]
  %v24 = vld [vmem:[%s0 + $0x68] sm:$0xff]
  %v25 = vld [vmem:[%s0 + $0x70] sm:$0xff]
  %v26 = vld [vmem:[%s0 + $0x78] sm:$0xff]
  %v27 = vld [vmem:[%s1] sm:$0xff]
  %v28 = vld [vmem:[%s1 + $0x8] sm:$0xff]
  %v29 = vld [vmem:[%s1 + $0x10] sm:$0xff]
  %v30 = vld [vmem:[%s1 + $0x18] sm:$0xff]
  %v31 = vld [vmem:[%s1 + $0x20] sm:$0xff]
  %v32 = vld [vmem:[%s1 + $0x28] sm:$0xff]
  %v33 = vld [vmem:[%s1 + $0x30] sm:$0xff]
  %v34 = vld [vmem:[%s1 + $0x38] sm:$0xff]
  %vm35 = vcmask 523264
  %v37 = vsel %vm35, %v11, 0
  %v40 = vsel %vm35, %v12, 0
  %v43 = vsel %vm35, %v13, 0
  %v46 = vsel %vm35, %v14, 0
  %v49 = vsel %vm35, %v15, 0
  %v52 = vsel %vm35, %v16, 0
  %v55 = vsel %vm35, %v17, 0
  %v58 = vsel %vm35, %v18, 0
  %v61 = vsel %vm35, %v19, 0
  %v64 = vsel %vm35, %v20, 0
  %v67 = vsel %vm35, %v21, 0
  %v70 = vsel %vm35, %v22, 0
  %v73 = vsel %vm35, %v23, 0
  %v76 = vsel %vm35, %v24, 0
  %v79 = vsel %vm35, %v25, 0
  %v82 = vsel %vm35, %v26, 0
  %84 = vmatpush.msra.mxu0 0.0
  %85 = vmatpush.msra.mxu0 0.0
  %86 = vmatpush.msra.mxu0 0.0
  %87 = vmatpush.msra.mxu0 0.0
  %88 = vmatpush.msra.mxu0 0.0
  %89 = vmatpush.msra.mxu0 0.0
  %90 = vmatpush.msra.mxu0 0.0
  %91 = vmatpush.msra.mxu0 0.0
  %92 = vmatpush.msra.mxu0 %v34
  %93 = vmatpush.msra.mxu0 %v33
  %94 = vmatpush.msra.mxu0 %v32
  %95 = vmatpush.msra.mxu0 %v31
  %96 = vmatpush.msra.mxu0 %v30
  %97 = vmatpush.msra.mxu0 %v29
  %98 = vmatpush.msra.mxu0 %v28
  %99 = vmatpush.msra.mxu0 %v27
  %100 = vmatmul.f32.gmra.mxu0 %v37
  %v101 = vpop.f32.mrf.mxu0
  %v102 = vadd.f32 0.0, %v101
  %103 = vmatmul.f32.gmra.mxu0 %v40
  %v104 = vpop.f32.mrf.mxu0
  %v105 = vadd.f32 0.0, %v104
  %106 = vmatmul.f32.gmra.mxu0 %v43
  %v107 = vpop.f32.mrf.mxu0
  %v108 = vadd.f32 0.0, %v107
  %109 = vmatmul.f32.gmra.mxu0 %v46
  %v110 = vpop.f32.mrf.mxu0
  %v111 = vadd.f32 0.0, %v110
  %112 = vmatmul.f32.gmra.mxu0 %v49
  %v113 = vpop.f32.mrf.mxu0
  %v114 = vadd.f32 0.0, %v113
  %115 = vmatmul.f32.gmra.mxu0 %v52
  %v116 = vpop.f32.mrf.mxu0
  %v117 = vadd.f32 0.0, %v116
  %118 = vmatmul.f32.gmra.mxu0 %v55
  %v119 = vpop.f32.mrf.mxu0
  %v120 = vadd.f32 0.0, %v119
  %121 = vmatmul.f32.gmra.mxu0 %v58
  %v122 = vpop.f32.mrf.mxu0
  %v123 = vadd.f32 0.0, %v122
  %124 = vmatmul.f32.gmra.mxu0 %v61
  %v125 = vpop.f32.mrf.mxu0
  %v126 = vadd.f32 0.0, %v125
  %127 = vmatmul.f32.gmra.mxu0 %v64
  %v128 = vpop.f32.mrf.mxu0
  %v129 = vadd.f32 0.0, %v128
  %130 = vmatmul.f32.gmra.mxu0 %v67
  %v131 = vpop.f32.mrf.mxu0
  %v132 = vadd.f32 0.0, %v131
  %133 = vmatmul.f32.gmra.mxu0 %v70
  %v134 = vpop.f32.mrf.mxu0
  %v135 = vadd.f32 0.0, %v134
  %136 = vmatmul.f32.gmra.mxu0 %v73
  %v137 = vpop.f32.mrf.mxu0
  %v138 = vadd.f32 0.0, %v137
  %139 = vmatmul.f32.gmra.mxu0 %v76
  %v140 = vpop.f32.mrf.mxu0
  %v141 = vadd.f32 0.0, %v140
  %142 = vmatmul.f32.gmra.mxu0 %v79
  %v143 = vpop.f32.mrf.mxu0
  %v144 = vadd.f32 0.0, %v143
  %145 = vmatmul.f32.gmra.mxu0 %v82
  %v146 = vpop.f32.mrf.mxu0
  %v147 = vadd.f32 0.0, %v146
  %148 = vdwg.mxu0
  %vm149 = vcmp.ge.f32.partialorder %v102, 0.0
  %vm150 = vcmp.ge.f32.partialorder %v105, 0.0
  %vm151 = vcmp.ge.f32.partialorder %v108, 0.0
  %vm152 = vcmp.ge.f32.partialorder %v111, 0.0
  %vm153 = vcmp.ge.f32.partialorder %v114, 0.0
  %vm154 = vcmp.ge.f32.partialorder %v117, 0.0
  %vm155 = vcmp.ge.f32.partialorder %v120, 0.0
  %vm156 = vcmp.ge.f32.partialorder %v123, 0.0
  %vm157 = vcmp.ge.f32.partialorder %v126, 0.0
  %vm158 = vcmp.ge.f32.partialorder %v129, 0.0
  %vm159 = vcmp.ge.f32.partialorder %v132, 0.0
  %vm160 = vcmp.ge.f32.partialorder %v135, 0.0
  %vm161 = vcmp.ge.f32.partialorder %v138, 0.0
  %vm162 = vcmp.ge.f32.partialorder %v141, 0.0
  %vm163 = vcmp.ge.f32.partialorder %v144, 0.0
  %vm164 = vcmp.ge.f32.partialorder %v147, 0.0
  %v165 = vmul.f32 %v102, 0.2
  %v166 = vmul.f32 %v105, 0.2
  %v167 = vmul.f32 %v108, 0.2
  %v168 = vmul.f32 %v111, 0.2
  %v169 = vmul.f32 %v114, 0.2
  %v170 = vmul.f32 %v117, 0.2
  %v171 = vmul.f32 %v120, 0.2
  %v172 = vmul.f32 %v123, 0.2
  %v173 = vmul.f32 %v126, 0.2
  %v174 = vmul.f32 %v129, 0.2
  %v175 = vmul.f32 %v132, 0.2
  %v176 = vmul.f32 %v135, 0.2
  %v177 = vmul.f32 %v138, 0.2
  %v178 = vmul.f32 %v141, 0.2
  %v179 = vmul.f32 %v144, 0.2
  %v180 = vmul.f32 %v147, 0.2
  %v181 = vsel %vm149, %v102, %v165
  %v182 = vsel %vm150, %v105, %v166
  %v183 = vsel %vm151, %v108, %v167
  %v184 = vsel %vm152, %v111, %v168
  %v185 = vsel %vm153, %v114, %v169
  %v186 = vsel %vm154, %v117, %v170
  %v187 = vsel %vm155, %v120, %v171
  %v188 = vsel %vm156, %v123, %v172
  %v189 = vsel %vm157, %v126, %v173
  %v190 = vsel %vm158, %v129, %v174
  %v191 = vsel %vm159, %v132, %v175
  %v192 = vsel %vm160, %v135, %v176
  %v193 = vsel %vm161, %v138, %v177
  %v194 = vsel %vm162, %v141, %v178
  %v195 = vsel %vm163, %v144, %v179
  %v196 = vsel %vm164, %v147, %v180
  %vm197 = vcmask 64512
  %198 = vst.msk [vmem:[%s2] sm:$0xff] %vm197, %v181
  %199 = vst.msk [vmem:[%s2 + $0x8] sm:$0xff] %vm197, %v182
  %200 = vst.msk [vmem:[%s2 + $0x10] sm:$0xff] %vm197, %v183
  %201 = vst.msk [vmem:[%s2 + $0x18] sm:$0xff] %vm197, %v184
  %202 = vst.msk [vmem:[%s2 + $0x20] sm:$0xff] %vm197, %v185
  %203 = vst.msk [vmem:[%s2 + $0x28] sm:$0xff] %vm197, %v186
  %204 = vst.msk [vmem:[%s2 + $0x30] sm:$0xff] %vm197, %v187
  %205 = vst.msk [vmem:[%s2 + $0x38] sm:$0xff] %vm197, %v188
  %206 = vst.msk [vmem:[%s2 + $0x40] sm:$0xff] %vm197, %v189
  %207 = vst.msk [vmem:[%s2 + $0x48] sm:$0xff] %vm197, %v190
  %208 = vst.msk [vmem:[%s2 + $0x50] sm:$0xff] %vm197, %v191
  %209 = vst.msk [vmem:[%s2 + $0x58] sm:$0xff] %vm197, %v192
  %210 = vst.msk [vmem:[%s2 + $0x60] sm:$0xff] %vm197, %v193
  %211 = vst.msk [vmem:[%s2 + $0x68] sm:$0xff] %vm197, %v194
  %212 = vst.msk [vmem:[%s2 + $0x70] sm:$0xff] %vm197, %v195
  %213 = vst.msk [vmem:[%s2 + $0x78] sm:$0xff] %vm197, %v196
  // Predicated region
  $region10: #{unet_forward.4} parent=0 // pred_check
    _
  $region11: #{unet_forward.4} parent=0 // pred_check_branch
    %215 = sbr.rel (0) target = $region13
  $region12: #{unet_forward.4} parent=0 // pred_region
    _
  $region13: #{unet_forward.4} parent=0 // pred_fallthru
    _
  // Predicated region
  $region14: #{unet_forward.4} parent=0 // pred_check
    _
  $region15: #{unet_forward.4} parent=0 // pred_check_branch
    %217 = sbr.rel (0) target = $region17
  $region16: #{unet_forward.4} parent=0 // pred_region
    _
  $region17: #{unet_forward.4} parent=0 // pred_fallthru
    _

// kernel: unet_forward.5
$region0: #{unet_forward.5}
  #allocation0 [shape = 'u32[]', space=smem, size = 0x4, offset = 0x4, fixed_abs, tag = 'smem constant byte address 0x4 - core index']
  #allocation1 [shape = 'u32[72,128]{1,0:T(1,128)}', space=vmem, size = 0x9000, scoped, tag = 'internal scratch']
  %s0 = inlined_call_operand.vmem [shape: f32[104,128], index: 0, kind: input, shape index: {}]
  %s1 = inlined_call_operand.vmem [shape: f32[128,16], index: 1, kind: input, shape index: {}]
  %s2 = inlined_call_operand.vmem [shape: f32[104,16], index: 2, kind: output, shape index: {0}]
  %s3 = inlined_call_operand.vmem [shape: f32[1,8,16], index: 3, kind: output, shape index: {1}]
  %4 = xla_tuple %s2, %s3
  %s5 = sld [smem:[#allocation0]]
  $region26: #{unet_forward.5} parent=0
    _
  %s7 = ssub.s32 1, %s5
  %s8 = scalar_select 0, %s7, %s5
  // Predicated region
  $region2: #{unet_forward.5} parent=0 // pred_check
    _
  $region3: #{unet_forward.5} parent=0 // pred_check_branch
    %10 = sbr.rel (0) target = $region5
  $region4: #{unet_forward.5} parent=0 // pred_region
    _
  $region5: #{unet_forward.5} parent=0 // pred_fallthru
    _
  // Predicated region
  $region6: #{unet_forward.5} parent=0 // pred_check
    _
  $region7: #{unet_forward.5} parent=0 // pred_check_branch
    %12 = sbr.rel (0) target = $region9
  $region8: #{unet_forward.5} parent=0 // pred_region
    _
  $region9: #{unet_forward.5} parent=0 // pred_fallthru
    _
  %v13 = vld [vmem:[%s0] sm:$0xff]
  %v14 = vld [vmem:[%s0 + $0x8] sm:$0xff]
  %v15 = vld [vmem:[%s0 + $0x10] sm:$0xff]
  %v16 = vld [vmem:[%s0 + $0x18] sm:$0xff]
  %v17 = vld [vmem:[%s0 + $0x20] sm:$0xff]
  %v18 = vld [vmem:[%s0 + $0x28] sm:$0xff]
  %v19 = vld [vmem:[%s0 + $0x30] sm:$0xff]
  %v20 = vld [vmem:[%s0 + $0x38] sm:$0xff]
  %v21 = vld [vmem:[%s0 + $0x40] sm:$0xff]
  %v22 = vld [vmem:[%s0 + $0x48] sm:$0xff]
  %v23 = vld [vmem:[%s0 + $0x50] sm:$0xff]
  %v24 = vld [vmem:[%s0 + $0x58] sm:$0xff]
  %v25 = vld [vmem:[%s0 + $0x60] sm:$0xff]
  %v26 = vld [vmem:[%s1] sm:$0xff]
  %v27 = vld [vmem:[%s1 + $0x8] sm:$0xff]
  %v28 = vld [vmem:[%s1 + $0x10] sm:$0xff]
  %v29 = vld [vmem:[%s1 + $0x18] sm:$0xff]
  %v30 = vld [vmem:[%s1 + $0x20] sm:$0xff]
  %v31 = vld [vmem:[%s1 + $0x28] sm:$0xff]
  %v32 = vld [vmem:[%s1 + $0x30] sm:$0xff]
  %v33 = vld [vmem:[%s1 + $0x38] sm:$0xff]
  %v34 = vld [vmem:[%s1 + $0x40] sm:$0xff]
  %v35 = vld [vmem:[%s1 + $0x48] sm:$0xff]
  %v36 = vld [vmem:[%s1 + $0x50] sm:$0xff]
  %v37 = vld [vmem:[%s1 + $0x58] sm:$0xff]
  %v38 = vld [vmem:[%s1 + $0x60] sm:$0xff]
  %v39 = vld [vmem:[%s1 + $0x68] sm:$0xff]
  %v40 = vld [vmem:[%s1 + $0x70] sm:$0xff]
  %v41 = vld [vmem:[%s1 + $0x78] sm:$0xff]
  %42 = vmatpush.msra.mxu0 %v41
  %43 = vmatpush.msra.mxu0 %v40
  %44 = vmatpush.msra.mxu0 %v39
  %45 = vmatpush.msra.mxu0 %v38
  %46 = vmatpush.msra.mxu0 %v37
  %47 = vmatpush.msra.mxu0 %v36
  %48 = vmatpush.msra.mxu0 %v35
  %49 = vmatpush.msra.mxu0 %v34
  %50 = vmatpush.msra.mxu0 %v33
  %51 = vmatpush.msra.mxu0 %v32
  %52 = vmatpush.msra.mxu0 %v31
  %53 = vmatpush.msra.mxu0 %v30
  %54 = vmatpush.msra.mxu0 %v29
  %55 = vmatpush.msra.mxu0 %v28
  %56 = vmatpush.msra.mxu0 %v27
  %57 = vmatpush.msra.mxu0 %v26
  %58 = vmatmul.f32.gmra.mxu0 %v13
  %v59 = vpop.f32.mrf.mxu0
  %v60 = vadd.f32 0.0, %v59
  %61 = vmatmul.f32.gmra.mxu0 %v14
  %v62 = vpop.f32.mrf.mxu0
  %v63 = vadd.f32 0.0, %v62
  %64 = vmatmul.f32.gmra.mxu0 %v15
  %v65 = vpop.f32.mrf.mxu0
  %v66 = vadd.f32 0.0, %v65
  %67 = vmatmul.f32.gmra.mxu0 %v16
  %v68 = vpop.f32.mrf.mxu0
  %v69 = vadd.f32 0.0, %v68
  %70 = vmatmul.f32.gmra.mxu0 %v17
  %v71 = vpop.f32.mrf.mxu0
  %v72 = vadd.f32 0.0, %v71
  %73 = vmatmul.f32.gmra.mxu0 %v18
  %v74 = vpop.f32.mrf.mxu0
  %v75 = vadd.f32 0.0, %v74
  %76 = vmatmul.f32.gmra.mxu0 %v19
  %v77 = vpop.f32.mrf.mxu0
  %v78 = vadd.f32 0.0, %v77
  %79 = vmatmul.f32.gmra.mxu0 %v20
  %v80 = vpop.f32.mrf.mxu0
  %v81 = vadd.f32 0.0, %v80
  %82 = vmatmul.f32.gmra.mxu0 %v21
  %v83 = vpop.f32.mrf.mxu0
  %v84 = vadd.f32 0.0, %v83
  %85 = vmatmul.f32.gmra.mxu0 %v22
  %v86 = vpop.f32.mrf.mxu0
  %v87 = vadd.f32 0.0, %v86
  %88 = vmatmul.f32.gmra.mxu0 %v23
  %v89 = vpop.f32.mrf.mxu0
  %v90 = vadd.f32 0.0, %v89
  %91 = vmatmul.f32.gmra.mxu0 %v24
  %v92 = vpop.f32.mrf.mxu0
  %v93 = vadd.f32 0.0, %v92
  %94 = vmatmul.f32.gmra.mxu0 %v25
  %v95 = vpop.f32.mrf.mxu0
  %v96 = vadd.f32 0.0, %v95
  %97 = vdwg.mxu0
  %vm98 = vcmask 130048
  %v99 = vsel %vm98, %v60, 0.0
  %v100 = vsel %vm98, %v63, 0.0
  %v101 = vadd.f32 %v99, %v100
  %v102 = vsel %vm98, %v66, 0.0
  %v103 = vadd.f32 %v101, %v102
  %v104 = vsel %vm98, %v69, 0.0
  %v105 = vadd.f32 %v103, %v104
  %v106 = vsel %vm98, %v72, 0.0
  %v107 = vadd.f32 %v105, %v106
  %v108 = vsel %vm98, %v75, 0.0
  %v109 = vadd.f32 %v107, %v108
  %v110 = vsel %vm98, %v78, 0.0
  %v111 = vadd.f32 %v109, %v110
  %v112 = vsel %vm98, %v81, 0.0
  %v113 = vadd.f32 %v111, %v112
  %v114 = vsel %vm98, %v84, 0.0
  %v115 = vadd.f32 %v113, %v114
  %v116 = vsel %vm98, %v87, 0.0
  %v117 = vadd.f32 %v115, %v116
  %v118 = vsel %vm98, %v90, 0.0
  %v119 = vadd.f32 %v117, %v118
  %v120 = vsel %vm98, %v93, 0.0
  %v121 = vadd.f32 %v119, %v120
  %v122 = vsel %vm98, %v96, 0.0
  %v123 = vadd.f32 %v121, %v122
  %v124 = vrot.slane %v123, 4
  %v125 = vadd.f32 %v123, %v124
  %v126 = vrot.slane %v125, 2
  %v127 = vadd.f32 %v125, %v126
  %v128 = vrot.slane %v127, 1
  %v129 = vadd.f32 %v127, %v128
  %v130 = vmul.f32 %v60, %v60
  %v131 = vmul.f32 %v63, %v63
  %v132 = vmul.f32 %v66, %v66
  %v133 = vmul.f32 %v69, %v69
  %v134 = vmul.f32 %v72, %v72
  %v135 = vmul.f32 %v75, %v75
  %v136 = vmul.f32 %v78, %v78
  %v137 = vmul.f32 %v81, %v81
  %v138 = vmul.f32 %v84, %v84
  %v139 = vmul.f32 %v87, %v87
  %v140 = vmul.f32 %v90, %v90
  %v141 = vmul.f32 %v93, %v93
  %v142 = vmul.f32 %v96, %v96
  %v143 = vsel %vm98, %v130, 0.0
  %v144 = vsel %vm98, %v131, 0.0
  %v145 = vadd.f32 %v143, %v144
  %v146 = vsel %vm98, %v132, 0.0
  %v147 = vadd.f32 %v145, %v146
  %v148 = vsel %vm98, %v133, 0.0
  %v149 = vadd.f32 %v147, %v148
  %v150 = vsel %vm98, %v134, 0.0
  %v151 = vadd.f32 %v149, %v150
  %v152 = vsel %vm98, %v135, 0.0
  %v153 = vadd.f32 %v151, %v152
  %v154 = vsel %vm98, %v136, 0.0
  %v155 = vadd.f32 %v153, %v154
  %v156 = vsel %vm98, %v137, 0.0
  %v157 = vadd.f32 %v155, %v156
  %v158 = vsel %vm98, %v138, 0.0
  %v159 = vadd.f32 %v157, %v158
  %v160 = vsel %vm98, %v139, 0.0
  %v161 = vadd.f32 %v159, %v160
  %v162 = vsel %vm98, %v140, 0.0
  %v163 = vadd.f32 %v161, %v162
  %v164 = vsel %vm98, %v141, 0.0
  %v165 = vadd.f32 %v163, %v164
  %v166 = vsel %vm98, %v142, 0.0
  %v167 = vadd.f32 %v165, %v166
  %v168 = vrot.slane %v167, 4
  %v169 = vadd.f32 %v167, %v168
  %v170 = vrot.slane %v169, 2
  %v171 = vadd.f32 %v169, %v170
  %v172 = vrot.slane %v171, 1
  %v173 = vadd.f32 %v171, %v172
  %vm174 = vcmask 1040384
  %v175 = vsel %vm174, %v129, %v173
  %vm176 = vcmask 1041408
  %v177 = vsel %vm176, %v175, 0.0
  %178 = vst.msk [vmem:[%s3] sm:$0xff] %vm98, %v177
  %179 = vst.msk [vmem:[%s2] sm:$0xff] %vm98, %v60
  %180 = vst.msk [vmem:[%s2 + $0x8] sm:$0xff] %vm98, %v63
  %181 = vst.msk [vmem:[%s2 + $0x10] sm:$0xff] %vm98, %v66
  %182 = vst.msk [vmem:[%s2 + $0x18] sm:$0xff] %vm98, %v69
  %183 = vst.msk [vmem:[%s2 + $0x20] sm:$0xff] %vm98, %v72
  %184 = vst.msk [vmem:[%s2 + $0x28] sm:$0xff] %vm98, %v75
  %185 = vst.msk [vmem:[%s2 + $0x30] sm:$0xff] %vm98, %v78
  %186 = vst.msk [vmem:[%s2 + $0x38] sm:$0xff] %vm98, %v81
  %187 = vst.msk [vmem:[%s2 + $0x40] sm:$0xff] %vm98, %v84
  %188 = vst.msk [vmem:[%s2 + $0x48] sm:$0xff] %vm98, %v87
  %189 = vst.msk [vmem:[%s2 + $0x50] sm:$0xff] %vm98, %v90
  %190 = vst.msk [vmem:[%s2 + $0x58] sm:$0xff] %vm98, %v93
  %191 = vst.msk [vmem:[%s2 + $0x60] sm:$0xff] %vm98, %v96
  // Predicated region
  $region10: #{unet_forward.5} parent=0 // pred_check
    _
  $region11: #{unet_forward.5} parent=0 // pred_check_branch
    %193 = sbr.rel (0) target = $region13
  $region12: #{unet_forward.5} parent=0 // pred_region
    _
  $region13: #{unet_forward.5} parent=0 // pred_fallthru
    _
  // Predicated region
  $region14: #{unet_forward.5} parent=0 // pred_check
    _
  $region15: #{unet_forward.5} parent=0 // pred_check_branch
    %195 = sbr.rel (0) target = $region17
  $region16: #{unet_forward.5} parent=0 // pred_region
    _
  $region17: #{unet_forward.5} parent=0 // pred_fallthru
    _
  // Predicated region
  $region18: #{unet_forward.5} parent=0 // pred_check
    _
  $region19: #{unet_forward.5} parent=0 // pred_check_branch
    %197 = sbr.rel (0) target = $region21
  $region20: #{unet_forward.5} parent=0 // pred_region
    _
  $region21: #{unet_forward.5} parent=0 // pred_fallthru
    _
  // Predicated region
  $region22: #{unet_forward.5} parent=0 // pred_check
    _
  $region23: #{unet_forward.5} parent=0 // pred_check_branch
    %199 = sbr.rel (0) target = $region25
  $region24: #{unet_forward.5} parent=0 // pred_region
    _
  $region25: #{unet_forward.5} parent=0 // pred_fallthru
    _

// kernel: unet_forward.6
$region0: #{unet_forward.6}
  #allocation0 [shape = 'u32[]', space=smem, size = 0x4, offset = 0x4, fixed_abs, tag = 'smem constant byte address 0x4 - core index']
  #allocation1 [shape = 'u32[72,128]{1,0:T(1,128)}', space=vmem, size = 0x9000, scoped, tag = 'internal scratch']
  %s0 = inlined_call_operand.vmem [shape: f32[104,16], index: 0, kind: input, shape index: {}]
  %s1 = inlined_call_operand.vmem [shape: f32[1,16], index: 1, kind: input, shape index: {}]
  %s2 = inlined_call_operand.vmem [shape: f32[1,16], index: 2, kind: input, shape index: {}]
  %s3 = inlined_call_operand.vmem [shape: f32[104,16], index: 3, kind: output, shape index: {}]
  %s4 = sld [smem:[#allocation0]]
  $region22: #{unet_forward.6} parent=0
    _
  %s6 = ssub.s32 1, %s4
  %s7 = scalar_select 0, %s6, %s4
  // Predicated region
  $region2: #{unet_forward.6} parent=0 // pred_check
    _
  $region3: #{unet_forward.6} parent=0 // pred_check_branch
    %9 = sbr.rel (0) target = $region5
  $region4: #{unet_forward.6} parent=0 // pred_region
    _
  $region5: #{unet_forward.6} parent=0 // pred_fallthru
    _
  // Predicated region
  $region6: #{unet_forward.6} parent=0 // pred_check
    _
  $region7: #{unet_forward.6} parent=0 // pred_check_branch
    %11 = sbr.rel (0) target = $region9
  $region8: #{unet_forward.6} parent=0 // pred_region
    _
  $region9: #{unet_forward.6} parent=0 // pred_fallthru
    _
  // Predicated region
  $region10: #{unet_forward.6} parent=0 // pred_check
    _
  $region11: #{unet_forward.6} parent=0 // pred_check_branch
    %13 = sbr.rel (0) target = $region13
  $region12: #{unet_forward.6} parent=0 // pred_region
    _
  $region13: #{unet_forward.6} parent=0 // pred_fallthru
    _
  %v14 = vld [vmem:[%s0] sm:$0xff]
  %v15 = vld [vmem:[%s0 + $0x8] sm:$0xff]
  %v16 = vld [vmem:[%s0 + $0x10] sm:$0xff]
  %v17 = vld [vmem:[%s0 + $0x18] sm:$0xff]
  %v18 = vld [vmem:[%s0 + $0x20] sm:$0xff]
  %v19 = vld [vmem:[%s0 + $0x28] sm:$0xff]
  %v20 = vld [vmem:[%s0 + $0x30] sm:$0xff]
  %v21 = vld [vmem:[%s0 + $0x38] sm:$0xff]
  %v22 = vld [vmem:[%s0 + $0x40] sm:$0xff]
  %v23 = vld [vmem:[%s0 + $0x48] sm:$0xff]
  %v24 = vld [vmem:[%s0 + $0x50] sm:$0xff]
  %v25 = vld [vmem:[%s0 + $0x58] sm:$0xff]
  %v26 = vld [vmem:[%s0 + $0x60] sm:$0xff]
  %v27 = vld [vmem:[%s1] sm:$0x1]
  %v29 = vperm.slane %v27, 0
  %v31 = vmul.f32 %v14, %v29
  %v32 = vmul.f32 %v15, %v29
  %v33 = vmul.f32 %v16, %v29
  %v34 = vmul.f32 %v17, %v29
  %v35 = vmul.f32 %v18, %v29
  %v36 = vmul.f32 %v19, %v29
  %v37 = vmul.f32 %v20, %v29
  %v38 = vmul.f32 %v21, %v29
  %v39 = vmul.f32 %v22, %v29
  %v40 = vmul.f32 %v23, %v29
  %v41 = vmul.f32 %v24, %v29
  %v42 = vmul.f32 %v25, %v29
  %v43 = vmul.f32 %v26, %v29
  %v44 = vld [vmem:[%s2] sm:$0x1]
  %v46 = vperm.slane %v44, 0
  %v48 = vadd.f32 %v31, %v46
  %v49 = vadd.f32 %v32, %v46
  %v50 = vadd.f32 %v33, %v46
  %v51 = vadd.f32 %v34, %v46
  %v52 = vadd.f32 %v35, %v46
  %v53 = vadd.f32 %v36, %v46
  %v54 = vadd.f32 %v37, %v46
  %v55 = vadd.f32 %v38, %v46
  %v56 = vadd.f32 %v39, %v46
  %v57 = vadd.f32 %v40, %v46
  %v58 = vadd.f32 %v41, %v46
  %v59 = vadd.f32 %v42, %v46
  %v60 = vadd.f32 %v43, %v46
  %vm61 = vcmp.ge.f32.partialorder %v48, 0.0
  %vm62 = vcmp.ge.f32.partialorder %v49, 0.0
  %vm63 = vcmp.ge.f32.partialorder %v50, 0.0
  %vm64 = vcmp.ge.f32.partialorder %v51, 0.0
  %vm65 = vcmp.ge.f32.partialorder %v52, 0.0
  %vm66 = vcmp.ge.f32.partialorder %v53, 0.0
  %vm67 = vcmp.ge.f32.partialorder %v54, 0.0
  %vm68 = vcmp.ge.f32.partialorder %v55, 0.0
  %vm69 = vcmp.ge.f32.partialorder %v56, 0.0
  %vm70 = vcmp.ge.f32.partialorder %v57, 0.0
  %vm71 = vcmp.ge.f32.partialorder %v58, 0.0
  %vm72 = vcmp.ge.f32.partialorder %v59, 0.0
  %vm73 = vcmp.ge.f32.partialorder %v60, 0.0
  %v74 = vmul.f32 %v48, 0.2
  %v75 = vmul.f32 %v49, 0.2
  %v76 = vmul.f32 %v50, 0.2
  %v77 = vmul.f32 %v51, 0.2
  %v78 = vmul.f32 %v52, 0.2
  %v79 = vmul.f32 %v53, 0.2
  %v80 = vmul.f32 %v54, 0.2
  %v81 = vmul.f32 %v55, 0.2
  %v82 = vmul.f32 %v56, 0.2
  %v83 = vmul.f32 %v57, 0.2
  %v84 = vmul.f32 %v58, 0.2
  %v85 = vmul.f32 %v59, 0.2
  %v86 = vmul.f32 %v60, 0.2
  %v87 = vsel %vm61, %v48, %v74
  %v88 = vsel %vm62, %v49, %v75
  %v89 = vsel %vm63, %v50, %v76
  %v90 = vsel %vm64, %v51, %v77
  %v91 = vsel %vm65, %v52, %v78
  %v92 = vsel %vm66, %v53, %v79
  %v93 = vsel %vm67, %v54, %v80
  %v94 = vsel %vm68, %v55, %v81
  %v95 = vsel %vm69, %v56, %v82
  %v96 = vsel %vm70, %v57, %v83
  %v97 = vsel %vm71, %v58, %v84
  %v98 = vsel %vm72, %v59, %v85
  %v99 = vsel %vm73, %v60, %v86
  %vm100 = vcmask 130048
  %101 = vst.msk [vmem:[%s3] sm:$0xff] %vm100, %v87
  %102 = vst.msk [vmem:[%s3 + $0x8] sm:$0xff] %vm100, %v88
  %103 = vst.msk [vmem:[%s3 + $0x10] sm:$0xff] %vm100, %v89
  %104 = vst.msk [vmem:[%s3 + $0x18] sm:$0xff] %vm100, %v90
  %105 = vst.msk [vmem:[%s3 + $0x20] sm:$0xff] %vm100, %v91
  %106 = vst.msk [vmem:[%s3 + $0x28] sm:$0xff] %vm100, %v92
  %107 = vst.msk [vmem:[%s3 + $0x30] sm:$0xff] %vm100, %v93
  %108 = vst.msk [vmem:[%s3 + $0x38] sm:$0xff] %vm100, %v94
  %109 = vst.msk [vmem:[%s3 + $0x40] sm:$0xff] %vm100, %v95
  %110 = vst.msk [vmem:[%s3 + $0x48] sm:$0xff] %vm100, %v96
  %111 = vst.msk [vmem:[%s3 + $0x50] sm:$0xff] %vm100, %v97
  %112 = vst.msk [vmem:[%s3 + $0x58] sm:$0xff] %vm100, %v98
  %113 = vst.msk [vmem:[%s3 + $0x60] sm:$0xff] %vm100, %v99
  // Predicated region
  $region14: #{unet_forward.6} parent=0 // pred_check
    _
  $region15: #{unet_forward.6} parent=0 // pred_check_branch
    %115 = sbr.rel (0) target = $region17
  $region16: #{unet_forward.6} parent=0 // pred_region
    _
  $region17: #{unet_forward.6} parent=0 // pred_fallthru
    _
  // Predicated region
  $region18: #{unet_forward.6} parent=0 // pred_check
    _
  $region19: #{unet_forward.6} parent=0 // pred_check_branch
    %117 = sbr.rel (0) target = $region21
  $region20: #{unet_forward.6} parent=0 // pred_region
    _
  $region21: #{unet_forward.6} parent=0 // pred_fallthru
    _

// kernel: unet_forward.7
$region0: #{unet_forward.7}
  #allocation0 [shape = 'u32[]', space=smem, size = 0x4, offset = 0x4, fixed_abs, tag = 'smem constant byte address 0x4 - core index']
  #allocation1 [shape = 'u32[72,128]{1,0:T(1,128)}', space=vmem, size = 0x9000, scoped, tag = 'internal scratch']
  %s0 = inlined_call_operand.vmem [shape: f32[2,40,256], index: 0, kind: input, shape index: {}]
  %s1 = inlined_call_operand.vmem [shape: f32[256,32], index: 1, kind: input, shape index: {}]
  %s2 = inlined_call_operand.vmem [shape: f32[2,1,32], index: 2, kind: output, shape index: {0}]
  %s3 = inlined_call_operand.vmem [shape: f32[2,8,32], index: 3, kind: output, shape index: {1}]
  %4 = xla_tuple %s2, %s3
  %s5 = sld [smem:[#allocation0]]
  $region53: #{unet_forward.7} parent=0
    _
  %s7 = ssub.s32 1, %s5
  %s8 = scalar_select 0, %s7, %s5
  loop: start=0, step=1, limit=4
  $region2: #{unet_forward.7} parent=0 // loop_pre_header
    _
  $region3: #{unet_forward.7} parent=0 // loop_header
    %s10 = sphi 0, %s14
    %p11 = scmp.ge.s32.totalorder %s10, 4
    %s17 = sphi 0, %s29
    %s18 = sphi 0, %s25
    %s19 = sphi 0, %s17
    %s20 = sphi 0, %s18
    %s21 = sphi 0, %s19
    %s22 = sphi 0, %s20
    %s34 = sphi 0, %s36
    %s37 = sphi 0, %s34
    %s38 = sphi 0, %s37
    %s54 = sphi 0, %s38
    %s58 = sphi 0, %s58
    %s60 = sphi 0, %s58
    %s61 = sphi 0, %s60
    %s75 = sphi 0, %s61
    %s81 = sphi 0, %s83
    %s84 = sphi 0, %s81
    %s85 = sphi 0, %s84
    %s101 = sphi 0, %s85
    %s107 = sphi 0, %s109
    %s110 = sphi 0, %s107
    %s111 = sphi 0, %s110
    %s127 = sphi 0, %s111
  $region4: #{unet_forward.7} parent=0 // loop_header_branch
    %13 = sbr.rel (%p11) target = $region8
  $region5: #{unet_forward.7} parent=0 // loop_body
    %s15 = ssub.s32 %s10, 1
    %s16 = ssub.s32 %s10, 2
    %s23 = sadd.s32 1, %s18
    %p24 = scmp.ge.s32.totalorder %s23, 1
    %s25 = scalar_select %p24, 0, %s23
    %s26 = sadd.s32 1, %s17
    %s27 = scalar_select %p24, %s26, %s17
    %p28 = scmp.ge.s32.totalorder %s27, 2
    %s29 = scalar_select %p28, 0, %s27
    %s30 = ssub.s32 %s17, %s29
    %s31 = ssub.s32 %s18, %s25
    %s32 = sor.u32 %s30, %s31
    %p33 = scmp.eq.s32.totalorder %s32, 0
    %s35 = sadd.s32 %s34, 1
    %s36 = scalar_select %p33, %s34, %s35
    %p39 = pneg %p33
    %p40 = scmp.eq.s32.totalorder %s10, 1
    %p41 = por %p39, %p40
    %p42 = scmp.ne.s32.totalorder %s34, %s37
    %p43 = scmp.eq.s32.totalorder %s10, 0
    %p44 = por %p42, %p43
    %p45 = scmp.ne.s32.totalorder %s34, %s37
    %p46 = scmp.eq.s32.totalorder %s15, 1
    %p47 = por %p45, %p46
    %p48 = scmp.ne.s32.totalorder %s37, %s38
    %p49 = scmp.eq.s32.totalorder %s15, 0
    %p50 = por %p48, %p49
    %p51 = scmp.ne.s32.totalorder %s37, %s38
    %p52 = scmp.eq.s32.totalorder %s16, 1
    %p53 = por %p51, %p52
    %p55 = scmp.ne.s32.totalorder %s38, %s54
    %p56 = scmp.eq.s32.totalorder %s16, 0
    %p57 = por %p55, %p56
    %s59 = sadd.s32 %s58, 1
    %p62 = scmp.eq.s32.totalorder %s10, 1
    %p63 = scmp.ne.s32.totalorder %s58, %s60
    %p64 = scmp.eq.s32.totalorder %s10, 0
    %p65 = por %p63, %p64
    %p66 = scmp.ne.s32.totalorder %s58, %s60
    %p67 = scmp.eq.s32.totalorder %s15, 1
    %p68 = por %p66, %p67
    %p69 = scmp.ne.s32.totalorder %s60, %s61
    %p70 = scmp.eq.s32.totalorder %s15, 0
    %p71 = por %p69, %p70
    %p72 = scmp.ne.s32.totalorder %s60, %s61
    %p73 = scmp.eq.s32.totalorder %s16, 1
    %p74 = por %p72, %p73
    %p76 = scmp.ne.s32.totalorder %s61, %s75
    %p77 = scmp.eq.s32.totalorder %s16, 0
    %p78 = por %p76, %p77
    %s79 = ssub.s32 %s17, %s29
    %p80 = scmp.eq.s32.totalorder %s79, 0
    %s82 = sadd.s32 %s81, 1
    %s83 = scalar_select %p80, %s81, %s82
    %p86 = pneg %p80
    %p87 = scmp.eq.s32.totalorder %s10, 1
    %p88 = por %p86, %p87
    %p89 = scmp.ne.s32.totalorder %s81, %s84
    %p90 = scmp.eq.s32.totalorder %s10, 0
    %p91 = por %p89, %p90
    %p92 = scmp.ne.s32.totalorder %s81, %s84
    %p93 = scmp.eq.s32.totalorder %s15, 1
    %p94 = por %p92, %p93
    %p95 = scmp.ne.s32.totalorder %s84, %s85
    %p96 = scmp.eq.s32.totalorder %s15, 0
    %p97 = por %p95, %p96
    %p98 = scmp.ne.s32.totalorder %s84, %s85
    %p99 = scmp.eq.s32.totalorder %s16, 1
    %p100 = por %p98, %p99
    %p102 = scmp.ne.s32.totalorder %s85, %s101
    %p103 = scmp.eq.s32.totalorder %s16, 0
    %p104 = por %p102, %p103
    %s105 = ssub.s32 %s17, %s29
    %p106 = scmp.eq.s32.totalorder %s105, 0
    %s108 = sadd.s32 %s107, 1
    %s109 = scalar_select %p106, %s107, %s108
    %p112 = pneg %p106
    %p113 = scmp.eq.s32.totalorder %s10, 1
    %p114 = por %p112, %p113
    %p115 = scmp.ne.s32.totalorder %s107, %s110
    %p116 = scmp.eq.s32.totalorder %s10, 0
    %p117 = por %p115, %p116
    %p118 = scmp.ne.s32.totalorder %s107, %s110
    %p119 = scmp.eq.s32.totalorder %s15, 1
    %p120 = por %p118, %p119
    %p121 = scmp.ne.s32.totalorder %s110, %s111
    %p122 = scmp.eq.s32.totalorder %s15, 0
    %p123 = por %p121, %p122
    %p124 = scmp.ne.s32.totalorder %s110, %s111
    %p125 = scmp.eq.s32.totalorder %s16, 1
    %p126 = por %p124, %p125
    %p128 = scmp.ne.s32.totalorder %s111, %s127
    %p129 = scmp.eq.s32.totalorder %s16, 0
    %p130 = por %p128, %p129
    %p131 = scmp.le.s32.totalorder 1, %s10
    %p132 = scmp.lt.s32.totalorder %s10, 3
    %p133 = pnand %p131, %p132
    %p134 = pneg %p133
    // Predicated region
    $region9: #{unet_forward.7} parent=5 // pred_check
      _
    $region10: #{unet_forward.7} parent=5 // pred_check_branch
      %136 = sbr.rel (%p133) target = $region12
    $region11: #{unet_forward.7} parent=5 // pred_region
      %s137 = ssub.s32 %s10, 1
      // Predicated region
      $region13: #{unet_forward.7} parent=11 // pred_check
        %p138 = pneg %p71
      $region14: #{unet_forward.7} parent=11 // pred_check_branch
        %140 = sbr.rel (%p138) target = $region16
      $region15: #{unet_forward.7} parent=11 // pred_region
        _
      $region16: #{unet_forward.7} parent=11 // pred_fallthru
        _
    $region12: #{unet_forward.7} parent=5 // pred_fallthru
      _
    %p141 = scmp.lt.s32.totalorder %s10, 2
    // Predicated region
    $region17: #{unet_forward.7} parent=5 // pred_check
      %p142 = pneg %p141
    $region18: #{unet_forward.7} parent=5 // pred_check_branch
      %144 = sbr.rel (%p142) target = $region20
    $region19: #{unet_forward.7} parent=5 // pred_region
      // Predicated region
      $region21: #{unet_forward.7} parent=19 // pred_check
        %p145 = pneg %p44
      $region22: #{unet_forward.7} parent=19 // pred_check_branch
        %147 = sbr.rel (%p145) target = $region24
      $region23: #{unet_forward.7} parent=19 // pred_region
        %s148 = smul.u32 5, %s18
        %p149 = scmp.lt.s32.totalorder %s17, 1
        %s150 = scalar_select %p149, %s17, 1
        %p151 = scmp.lt.s32.totalorder %s148, 4
        %s152 = scalar_select %p151, %s148, 4
        %s153 = smul.addr %s152, 2
        %s154 = smul.addr %s150, 10
        %s155 = sadd.s32 %s153, %s154
        %s156 = smul.addr %s155, 8
        %s157 = scalar_lea.vmem %s0, %s156
        %s158 = smul.u32 5, %s18
      $region24: #{unet_forward.7} parent=19 // pred_fallthru
        _
    $region20: #{unet_forward.7} parent=5 // pred_fallthru
      _
    %p159 = scmp.le.s32.totalorder 1, %s10
    %p160 = scmp.lt.s32.totalorder %s10, 3
    %p161 = pnand %p159, %p160
    %p162 = pneg %p161
    // Predicated region
    $region25: #{unet_forward.7} parent=5 // pred_check
      _
    $region26: #{unet_forward.7} parent=5 // pred_check_branch
      %164 = sbr.rel (%p161) target = $region28
    $region27: #{unet_forward.7} parent=5 // pred_region
      %s165 = ssub.s32 %s10, 1
      %s166 = smul.u32 5, %s20
      %p167 = scmp.lt.s32.totalorder %s19, 1
      %s168 = scalar_select %p167, %s19, 1
      %p169 = scmp.lt.s32.totalorder %s166, 4
      %s170 = scalar_select %p169, %s166, 4
      %s171 = smul.addr %s170, 2
      %s172 = smul.addr %s168, 10
      %s173 = sadd.s32 %s171, %s172
      %s174 = smul.addr %s173, 8
      %s175 = scalar_lea.vmem %s0, %s174
      %p176 = pneg %p50
      %p177 = pneg %p47
      %p178 = pneg %p71
      %p179 = pneg %p68
      %p180 = pneg %p97
      %p181 = pneg %p94
      %p182 = scmp.lt.s32.totalorder %s19, 1
      %s183 = scalar_select %p182, %s19, 1
      %s184 = scalar_lea.vmem %s2, %s183
      %p185 = pneg %p123
      %p186 = pneg %p120
      %p187 = scmp.lt.s32.totalorder %s19, 1
      %s188 = scalar_select %p187, %s19, 1
      %s189 = smul.addr %s188, 8
      %s190 = scalar_lea.vmem %s3, %s189
      %s191 = smul.u32 5, %s20
      %p192 = scmp.lt.s32.totalorder %s19, 1
      %s193 = scalar_select %p192, %s19, 1
      %p194 = scmp.lt.s32.totalorder %s191, 4
      %s195 = scalar_select %p194, %s191, 4
      %s196 = smul.addr %s195, 2
      %s197 = smul.addr %s193, 10
      %s198 = sadd.s32 %s196, %s197
      %s199 = smul.addr %s198, 8
      %s200 = scalar_lea.vmem %s0, %s199
      %s201 = smul.u32 5, %s20
      %p202 = scmp.lt.s32.totalorder %s19, 1
      %s203 = scalar_select %p202, %s19, 1
      %s204 = scalar_lea.vmem %s2, %s203
      %p205 = scmp.lt.s32.totalorder %s19, 1
      %s206 = scalar_select %p205, %s19, 1
      %s207 = smul.addr %s206, 8
      %s208 = scalar_lea.vmem %s3, %s207
      %v209 = vld [vmem:[%s200] sm:$0xff]
      %v210 = vld [vmem:[%s200 + $0x8] sm:$0xff]
      %v211 = vld [vmem:[%s200 + $0x10] sm:$0xff]
      %v212 = vld [vmem:[%s200 + $0x18] sm:$0xff]
      %v213 = vld [vmem:[%s200 + $0x20] sm:$0xff]
      %v214 = vld [vmem:[%s200 + $0x28] sm:$0xff]
      %v215 = vld [vmem:[%s200 + $0x30] sm:$0xff]
      %v216 = vld [vmem:[%s200 + $0x38] sm:$0xff]
      %v217 = vld [vmem:[%s200 + $0x40] sm:$0xff]
      %v218 = vld [vmem:[%s200 + $0x48] sm:$0xff]
      %v219 = vld [vmem:[%s1] sm:$0xff]
      %v220 = vld [vmem:[%s1 + $0x8] sm:$0xff]
      %v221 = vld [vmem:[%s1 + $0x10] sm:$0xff]
      %v222 = vld [vmem:[%s1 + $0x18] sm:$0xff]
      %v223 = vld [vmem:[%s1 + $0x20] sm:$0xff]
      %v224 = vld [vmem:[%s1 + $0x28] sm:$0xff]
      %v225 = vld [vmem:[%s1 + $0x30] sm:$0xff]
      %v226 = vld [vmem:[%s1 + $0x38] sm:$0xff]
      %v227 = vld [vmem:[%s1 + $0x40] sm:$0xff]
      %v228 = vld [vmem:[%s1 + $0x48] sm:$0xff]
      %v229 = vld [vmem:[%s1 + $0x50] sm:$0xff]
      %v230 = vld [vmem:[%s1 + $0x58] sm:$0xff]
      %v231 = vld [vmem:[%s1 + $0x60] sm:$0xff]
      %v232 = vld [vmem:[%s1 + $0x68] sm:$0xff]
      %v233 = vld [vmem:[%s1 + $0x70] sm:$0xff]
      %v234 = vld [vmem:[%s1 + $0x78] sm:$0xff]
      %v235 = vld [vmem:[%s1 + $0x80] sm:$0xff]
      %v236 = vld [vmem:[%s1 + $0x88] sm:$0xff]
      %v237 = vld [vmem:[%s1 + $0x90] sm:$0xff]
      %v238 = vld [vmem:[%s1 + $0x98] sm:$0xff]
      %v239 = vld [vmem:[%s1 + $0xa0] sm:$0xff]
      %v240 = vld [vmem:[%s1 + $0xa8] sm:$0xff]
      %v241 = vld [vmem:[%s1 + $0xb0] sm:$0xff]
      %v242 = vld [vmem:[%s1 + $0xb8] sm:$0xff]
      %v243 = vld [vmem:[%s1 + $0xc0] sm:$0xff]
      %v244 = vld [vmem:[%s1 + $0xc8] sm:$0xff]
      %v245 = vld [vmem:[%s1 + $0xd0] sm:$0xff]
      %v246 = vld [vmem:[%s1 + $0xd8] sm:$0xff]
      %v247 = vld [vmem:[%s1 + $0xe0] sm:$0xff]
      %v248 = vld [vmem:[%s1 + $0xe8] sm:$0xff]
      %v249 = vld [vmem:[%s1 + $0xf0] sm:$0xff]
      %v250 = vld [vmem:[%s1 + $0xf8] sm:$0xff]
      %251 = vmatpush.msra.mxu0 %v234
      %252 = vmatpush.msra.mxu0 %v233
      %253 = vmatpush.msra.mxu0 %v232
      %254 = vmatpush.msra.mxu0 %v231
      %255 = vmatpush.msra.mxu0 %v230
      %256 = vmatpush.msra.mxu0 %v229
      %257 = vmatpush.msra.mxu0 %v228
      %258 = vmatpush.msra.mxu0 %v227
      %259 = vmatpush.msra.mxu0 %v226
      %260 = vmatpush.msra.mxu0 %v225
      %261 = vmatpush.msra.mxu0 %v224
      %262 = vmatpush.msra.mxu0 %v223
      %263 = vmatpush.msra.mxu0 %v222
      %264 = vmatpush.msra.mxu0 %v221
      %265 = vmatpush.msra.mxu0 %v220
      %266 = vmatpush.msra.mxu0 %v219
      %267 = vmatmul.f32.gmra.mxu0 %v209
      %v268 = vpop.f32.mrf.mxu0
      %v269 = vadd.f32 0.0, %v268
      %270 = vmatmul.f32.gmra.mxu0 %v211
      %v271 = vpop.f32.mrf.mxu0
      %v272 = vadd.f32 0.0, %v271
      %273 = vmatmul.f32.gmra.mxu0 %v213
      %v274 = vpop.f32.mrf.mxu0
      %v275 = vadd.f32 0.0, %v274
      %276 = vmatmul.f32.gmra.mxu0 %v215
      %v277 = vpop.f32.mrf.mxu0
      %v278 = vadd.f32 0.0, %v277
      %279 = vmatmul.f32.gmra.mxu0 %v217
      %v280 = vpop.f32.mrf.mxu0
      %v281 = vadd.f32 0.0, %v280
      %282 = vdwg.mxu0
      %283 = vmatpush.msra.mxu0 %v250
      %284 = vmatpush.msra.mxu0 %v249
      %285 = vmatpush.msra.mxu0 %v248
      %286 = vmatpush.msra.mxu0 %v247
      %287 = vmatpush.msra.mxu0 %v246
      %288 = vmatpush.msra.mxu0 %v245
      %289 = vmatpush.msra.mxu0 %v244
      %290 = vmatpush.msra.mxu0 %v243
      %291 = vmatpush.msra.mxu0 %v242
      %292 = vmatpush.msra.mxu0 %v241
      %293 = vmatpush.msra.mxu0 %v240
      %294 = vmatpush.msra.mxu0 %v239
      %295 = vmatpush.msra.mxu0 %v238
      %296 = vmatpush.msra.mxu0 %v237
      %297 = vmatpush.msra.mxu0 %v236
      %298 = vmatpush.msra.mxu0 %v235
      %299 = vmatmul.f32.gmra.mxu0 %v210
      %v300 = vpop.f32.mrf.mxu0
      %v301 = vadd.f32 %v269, %v300
      %302 = vmatmul.f32.gmra.mxu0 %v212
      %v303 = vpop.f32.mrf.mxu0
      %v304 = vadd.f32 %v272, %v303
      %305 = vmatmul.f32.gmra.mxu0 %v214
      %v306 = vpop.f32.mrf.mxu0
      %v307 = vadd.f32 %v275, %v306
      %308 = vmatmul.f32.gmra.mxu0 %v216
      %v309 = vpop.f32.mrf.mxu0
      %v310 = vadd.f32 %v278, %v309
      %311 = vmatmul.f32.gmra.mxu0 %v218
      %v312 = vpop.f32.mrf.mxu0
      %v313 = vadd.f32 %v281, %v312
      %314 = vdwg.mxu0
      %vm315 = vcmask 261120
      %v316 = vsel %vm315, %v301, 0.0
      %v317 = vsel %vm315, %v304, 0.0
      %v318 = vadd.f32 %v316, %v317
      %v319 = vsel %vm315, %v307, 0.0
      %v320 = vadd.f32 %v318, %v319
      %v321 = vsel %vm315, %v310, 0.0
      %v322 = vadd.f32 %v320, %v321
      %v323 = vsel %vm315, %v313, 0.0
      %v324 = vadd.f32 %v322, %v323
      %v325 = vrot.slane %v324, 4
      %v326 = vadd.f32 %v324, %v325
      %v327 = vrot.slane %v326, 2
      %v328 = vadd.f32 %v326, %v327
      %v329 = vrot.slane %v328, 1
      %v330 = vadd.f32 %v328, %v329
      %v331 = vmul.f32 %v301, %v301
      %v332 = vmul.f32 %v304, %v304
      %v333 = vmul.f32 %v307, %v307
      %v334 = vmul.f32 %v310, %v310
      %v335 = vmul.f32 %v313, %v313
      %v336 = vsel %vm315, %v331, 0.0
      %v337 = vsel %vm315, %v332, 0.0
      %v338 = vadd.f32 %v336, %v337
      %v339 = vsel %vm315, %v333, 0.0
      %v340 = vadd.f32 %v338, %v339
      %v341 = vsel %vm315, %v334, 0.0
      %v342 = vadd.f32 %v340, %v341
      %v343 = vsel %vm315, %v335, 0.0
      %v344 = vadd.f32 %v342, %v343
      %v345 = vrot.slane %v344, 4
      %v346 = vadd.f32 %v344, %v345
      %v347 = vrot.slane %v346, 2
      %v348 = vadd.f32 %v346, %v347
      %v349 = vrot.slane %v348, 1
      %v350 = vadd.f32 %v348, %v349
      %p351 = scmp.eq.s32.totalorder %s20, 0
      // Predicated region
      $region29: #{unet_forward.7} parent=27 // pred_check
        %p352 = pneg %p351
      $region30: #{unet_forward.7} parent=27 // pred_check_branch
        %354 = sbr.rel (%p352) target = $region32
      $region31: #{unet_forward.7} parent=27 // pred_region
        %vm355 = vcmask 253952
        %356 = vst.msk [vmem:[%s204] sm:$0x1] %vm355, 0.0
        %357 = vst.msk [vmem:[%s208] sm:$0xff] %vm315, 0.0
      $region32: #{unet_forward.7} parent=27 // pred_fallthru
        _
      %v358 = vld [vmem:[%s204] sm:$0x1]
      %v359 = vadd.f32 %v358, %v330
      %vm360 = vcmask 253952
      %361 = vst.msk [vmem:[%s204] sm:$0x1] %vm360, %v359
      %v362 = vld [vmem:[%s208] sm:$0xff]
      %vm363 = vcmask 1040384
      %v364 = vsel %vm363, %v330, %v350
      %vm365 = vcmask 1041408
      %v366 = vsel %vm365, %v364, 0.0
      %v367 = vadd.f32 %v362, %v366
      %368 = vst.msk [vmem:[%s208] sm:$0xff] %vm315, %v367
      %p369 = scmp.lt.s32.totalorder %s19, 1
      %s370 = scalar_select %p369, %s19, 1
      %s371 = scalar_lea.vmem %s2, %s370
      %p372 = scmp.lt.s32.totalorder %s19, 1
      %s373 = scalar_select %p372, %s19, 1
      %s374 = smul.addr %s373, 8
      %s375 = scalar_lea.vmem %s3, %s374
      // Predicated region
      $region33: #{unet_forward.7} parent=27 // pred_check
        %p376 = pneg %p94
      $region34: #{unet_forward.7} parent=27 // pred_check_branch
        %378 = sbr.rel (%p376) target = $region36
      $region35: #{unet_forward.7} parent=27 // pred_region
        _
      $region36: #{unet_forward.7} parent=27 // pred_fallthru
        _
      // Predicated region
      $region37: #{unet_forward.7} parent=27 // pred_check
        %p379 = pneg %p120
      $region38: #{unet_forward.7} parent=27 // pred_check_branch
        %381 = sbr.rel (%p379) target = $region40
      $region39: #{unet_forward.7} parent=27 // pred_region
        _
      $region40: #{unet_forward.7} parent=27 // pred_fallthru
        _
    $region28: #{unet_forward.7} parent=5 // pred_fallthru
      _
    %p382 = scmp.le.s32.totalorder 2, %s10
    // Predicated region
    $region41: #{unet_forward.7} parent=5 // pred_check
      %p383 = pneg %p382
    $region42: #{unet_forward.7} parent=5 // pred_check_branch
      %385 = sbr.rel (%p383) target = $region44
    $region43: #{unet_forward.7} parent=5 // pred_region
      %s386 = ssub.s32 %s10, 2
      // Predicated region
      $region45: #{unet_forward.7} parent=43 // pred_check
        %p387 = pneg %p100
      $region46: #{unet_forward.7} parent=43 // pred_check_branch
        %389 = sbr.rel (%p387) target = $region48
      $region47: #{unet_forward.7} parent=43 // pred_region
        %p390 = scmp.lt.s32.totalorder %s21, 1
        %s391 = scalar_select %p390, %s21, 1
        %s392 = scalar_lea.vmem %s2, %s391
      $region48: #{unet_forward.7} parent=43 // pred_fallthru
        _
      // Predicated region
      $region49: #{unet_forward.7} parent=43 // pred_check
        %p393 = pneg %p126
      $region50: #{unet_forward.7} parent=43 // pred_check_branch
        %395 = sbr.rel (%p393) target = $region52
      $region51: #{unet_forward.7} parent=43 // pred_region
        %p396 = scmp.lt.s32.totalorder %s21, 1
        %s397 = scalar_select %p396, %s21, 1
        %s398 = smul.addr %s397, 8
        %s399 = scalar_lea.vmem %s3, %s398
      $region52: #{unet_forward.7} parent=43 // pred_fallthru
        _
    $region44: #{unet_forward.7} parent=5 // pred_fallthru
      _
  $region6: #{unet_forward.7} parent=0 // loop_footer
    %s14 = sadd.s32 1, %s10
  $region7: #{unet_forward.7} parent=0 // loop_footer_branch
    %9 = sbr.rel target = $region3
  $region8: #{unet_forward.7} parent=0 // loop_exit
    _

</llo_original>
